<compile_context>
chip_gen: v7x
topology: tpu7x:2x2x1
jax: 0.10.0
libtpu: 0.0.40
codegen_flags: <defaults>
</compile_context>

<pallas_src>
from functools import partial

import jax
import jax.numpy as jnp
from jax.experimental import pallas as pl
from jax.experimental.pallas import tpu as pltpu


# -----------------------------------------------------------------------------
# Pallas kernels
# -----------------------------------------------------------------------------
def _conv_row_kernel(x_ref, w_ref, b_ref, o_ref, acc_ref, *, kw, relu):
    """One padded input row -> one output row, accumulated over the KH grid axis.

    x_ref  : (1, 1, Wp, Cin)     bf16  padded input row (h + kh)
    w_ref  : (KH, KW, Cin, Cout) bf16  full weight, VMEM-resident (constant index_map)
    b_ref  : (1, Cout)           f32
    o_ref  : (1, 1, W, Cout)     bf16  output row h (revisited across the KH axis)
    acc_ref: (W, Cout)           f32   scratch accumulator
    """
    k = pl.program_id(2)

    @pl.when(k == 0)
    def _init():
        acc_ref[...] = jnp.zeros_like(acc_ref)

    w_out = o_ref.shape[2]
    xv = x_ref[0, 0]                     # (Wp, Cin)
    wk = w_ref.at[k]                     # Ref view: (KW, Cin, Cout), no load yet

    acc = acc_ref[...]
    for dj in range(kw):                 # short static unroll over KW taps (<=7)
        acc = acc + jnp.dot(xv[dj:dj + w_out, :], wk[dj],
                            preferred_element_type=jnp.float32)
    acc_ref[...] = acc

    @pl.when(k == pl.num_programs(2) - 1)
    def _finalize():
        r = acc + b_ref[...]             # f32 epilogue
        if relu:
            r = jnp.maximum(r, 0.0)
        o_ref[0, 0] = r.astype(o_ref.dtype)


def _mm_kernel(x_ref, w_ref, b_ref, o_ref, *, relu):
    """(TM, K) x (K, Cout) + bias (+ReLU).  Used for the folded Cin=3 first conv."""
    acc = jnp.dot(x_ref[...], w_ref[...], preferred_element_type=jnp.float32)
    acc = acc + b_ref[...]
    if relu:
        acc = jnp.maximum(acc, 0.0)
    o_ref[...] = acc.astype(o_ref.dtype)


def _head_kernel(x_ref, w1_ref, b1_ref, w2_ref, b2_ref, o_ref):
    """Fused stage head: 1x1 conv (+ReLU) -> 1x1 conv; mid activation stays in VMEM."""
    h = jnp.dot(x_ref[...], w1_ref[...], preferred_element_type=jnp.float32)
    h = jnp.maximum(h + b1_ref[...], 0.0).astype(w2_ref.dtype)
    o = jnp.dot(h, w2_ref[...], preferred_element_type=jnp.float32)
    o_ref[...] = (o + b2_ref[...]).astype(o_ref.dtype)


def _maxpool_kernel(x_ref, o_ref):
    """2x2/2 max pool of one row pair.  x_ref: (1,2,W,C) -> o_ref: (1,1,W//2,C)."""
    wo = o_ref.shape[2]
    c = o_ref.shape[3]
    rows = jnp.maximum(x_ref[0, 0], x_ref[0, 1])      # (W, C): max over the 2 rows
    pairs = rows.reshape(wo, 2, c)                    # split W into column pairs
    o_ref[0, 0] = jnp.maximum(pairs[:, 0, :], pairs[:, 1, :])


# -----------------------------------------------------------------------------
# Wrappers (one jit entry per distinct shape -> bounded compile count)
# -----------------------------------------------------------------------------
def _choose_tm(m):
    if m <= 512:
        return m                      # full block (always satisfies the (8,128) rule)
    for t in (512, 256, 128):
        if m % t == 0:
            return t
    return m


@partial(jax.jit, static_argnames=("relu",))
def _conv2d_spatial(x, w, b, relu=True):
    """Stride-1 'same' KxK conv, NHWC, bf16 in / bf16 out, f32 accumulation."""
    n, h, wd, cin = x.shape
    kh, kw, _, cout = w.shape
    pad = (kh - 1) // 2
    xp = jnp.pad(x, ((0, 0), (pad, pad), (pad, pad), (0, 0)))
    wp = wd + kw - 1
    return pl.pallas_call(
        partial(_conv_row_kernel, kw=kw, relu=relu),
        out_shape=jax.ShapeDtypeStruct((n, h, wd, cout), jnp.bfloat16),
        grid=(n, h, kh),
        in_specs=[
            # padded input: one row per grid step, shifted by the KH tap
            pl.BlockSpec((1, 1, wp, cin), lambda i, j, k: (i, j + k, 0, 0)),
            # full weight, VMEM-resident (constant index -> fetched once per conv)
            pl.BlockSpec((kh, kw, cin, cout), lambda i, j, k: (0, 0, 0, 0)),
            pl.BlockSpec((1, cout), lambda i, j, k: (0, 0)),
        ],
        out_specs=pl.BlockSpec((1, 1, wd, cout), lambda i, j, k: (i, j, 0, 0)),
        scratch_shapes=[pltpu.VMEM((wd, cout), jnp.float32)],
        compiler_params=pltpu.CompilerParams(
            dimension_semantics=("parallel", "parallel", "arbitrary")),
    )(xp, w, b)


def _matmul_bias_act(x2d, w2d, b2d, *, relu, out_dtype):
    m, kdim = x2d.shape
    cout = w2d.shape[-1]
    tm = _choose_tm(m)
    return pl.pallas_call(
        partial(_mm_kernel, relu=relu),
        out_shape=jax.ShapeDtypeStruct((m, cout), out_dtype),
        grid=(m // tm,),
        in_specs=[
            pl.BlockSpec((tm, kdim), lambda i: (i, 0)),
            pl.BlockSpec((kdim, cout), lambda i: (0, 0)),
            pl.BlockSpec((1, cout), lambda i: (0, 0)),
        ],
        out_specs=pl.BlockSpec((tm, cout), lambda i: (i, 0)),
        compiler_params=pltpu.CompilerParams(dimension_semantics=("parallel",)),
    )(x2d, w2d, b2d)


@partial(jax.jit, static_argnames=("relu",))
def _conv2d_folded(x, w, b, relu=True):
    """Small-contraction conv (e.g. Cin=3 first VGG conv): fold KH*KW taps into one matmul."""
    n, h, wd, cin = x.shape
    kh, kw, _, cout = w.shape
    pad = (kh - 1) // 2
    xp = jnp.pad(x, ((0, 0), (pad, pad), (pad, pad), (0, 0)))
    taps = [xp[:, i:i + h, j:j + wd, :] for i in range(kh) for j in range(kw)]
    xs = jnp.concatenate(taps, axis=-1).reshape(n * h * wd, kh * kw * cin)
    wr = w.reshape(kh * kw * cin, cout)
    out = _matmul_bias_act(xs, wr, b, relu=relu, out_dtype=jnp.bfloat16)
    return out.reshape(n, h, wd, cout)


def conv2d_nhwc(x, w, b, relu=True):
    kh, kw, cin, _ = w.shape
    if kh * kw * cin <= 128:            # first VGG conv (3x3x3 = 27 taps*channels)
        return _conv2d_folded(x, w, b, relu=relu)
    return _conv2d_spatial(x, w, b, relu=relu)


@jax.jit
def _stage_head(x, w1, b1, w2, b2):
    """Fused 1x1 (ReLU) + 1x1 stage head, tiled over M = N*H*W."""
    n, h, wd, c = x.shape
    mid = w1.shape[-1]
    cout = w2.shape[-1]
    m = n * h * wd
    tm = _choose_tm(m)
    out = pl.pallas_call(
        _head_kernel,
        out_shape=jax.ShapeDtypeStruct((m, cout), jnp.float32),
        grid=(m // tm,),
        in_specs=[
            pl.BlockSpec((tm, c), lambda i: (i, 0)),
            pl.BlockSpec((c, mid), lambda i: (0, 0)),
            pl.BlockSpec((1, mid), lambda i: (0, 0)),
            pl.BlockSpec((mid, cout), lambda i: (0, 0)),
            pl.BlockSpec((1, cout), lambda i: (0, 0)),
        ],
        out_specs=pl.BlockSpec((tm, cout), lambda i: (i, 0)),
        compiler_params=pltpu.CompilerParams(dimension_semantics=("parallel",)),
    )(x.reshape(m, c), w1, b1, w2, b2)
    return out.reshape(n, h, wd, cout)


@jax.jit
def maxpool2x2_nhwc(x):
    """MaxPool2d(kernel_size=2, stride=2) on NHWC, single blocked Pallas kernel."""
    n, h, w, c = x.shape
    ho, wo = h // 2, w // 2
    return pl.pallas_call(
        _maxpool_kernel,
        out_shape=jax.ShapeDtypeStruct((n, ho, wo, c), x.dtype),
        grid=(n, ho),
        in_specs=[pl.BlockSpec((1, 2, w, c), lambda i, j: (i, j, 0, 0))],
        out_specs=pl.BlockSpec((1, 1, wo, c), lambda i, j: (i, j, 0, 0)),
        compiler_params=pltpu.CompilerParams(
            dimension_semantics=("parallel", "parallel")),
    )(x)


# -----------------------------------------------------------------------------
# Deterministic parameter construction (synthetic, He-scaled normal init)
# -----------------------------------------------------------------------------
# VGG19.features[0:23] convs (pools after conv indices 1, 3, 7), then the DOPE
# replacements Conv(512,256,3)+ReLU, Conv(256,128,3)+ReLU.
_VGG_CHANNELS = ((3, 64), (64, 64), (64, 128), (128, 128),
                 (128, 256), (256, 256), (256, 256), (256, 256),
                 (256, 512), (512, 512), (512, 256), (256, 128))
_VGG_POOL_AFTER = (1, 3, 7)


def _conv_init(key, kh, kw, cin, cout):
    fan_in = kh * kw * cin
    w = (jax.random.normal(key, (kh, kw, cin, cout), jnp.float32)
         * jnp.sqrt(2.0 / fan_in)).astype(jnp.bfloat16)
    return dict(w=w, b=jnp.zeros((1, cout), jnp.float32))


def _dense_init(key, cin, cout):
    w = (jax.random.normal(key, (cin, cout), jnp.float32)
         * jnp.sqrt(2.0 / cin)).astype(jnp.bfloat16)
    return w, jnp.zeros((1, cout), jnp.float32)


def make_vgg(key):
    keys = jax.random.split(key, len(_VGG_CHANNELS))
    return [_conv_init(k, 3, 3, ci, co) for k, (ci, co) in zip(keys, _VGG_CHANNELS)]


def make_stage(key, in_ch, out_ch, first):
    if first:
        ksz, chans, mid = 3, [(in_ch, 128), (128, 128), (128, 128)], 512
    else:
        ksz, chans, mid = 7, [(in_ch, 128)] + [(128, 128)] * 4, 128
    keys = jax.random.split(key, len(chans) + 2)
    convs = [_conv_init(keys[i], ksz, ksz, ci, co) for i, (ci, co) in enumerate(chans)]
    w1, b1 = _dense_init(keys[-2], 128, mid)        # 1x1 conv + ReLU
    w2, b2 = _dense_init(keys[-1], mid, out_ch)     # final 1x1 conv, no ReLU
    return dict(convs=convs, head=dict(w1=w1, b1=b1, w2=w2, b2=b2))


def init_dope_params(key, num_belief=9, num_affinity=16, num_stages=6):
    kv, kb, ka = jax.random.split(key, 3)
    cascade_in = 128 + num_belief + num_affinity
    kbs = jax.random.split(kb, num_stages)
    kas = jax.random.split(ka, num_stages)
    belief = [make_stage(kbs[0], 128, num_belief, True)]
    affin = [make_stage(kas[0], 128, num_affinity, True)]
    for s in range(1, num_stages):
        belief.append(make_stage(kbs[s], cascade_in, num_belief, False))
        affin.append(make_stage(kas[s], cascade_in, num_affinity, False))
    return dict(vgg=make_vgg(kv), belief=belief, affin=affin)


# -----------------------------------------------------------------------------
# Forward pass (matches DopeNetwork.forward semantics)
# -----------------------------------------------------------------------------
def vgg_forward(convs, x):
    for idx, p in enumerate(convs):
        x = conv2d_nhwc(x, p['w'], p['b'], relu=True)
        if idx in _VGG_POOL_AFTER:
            x = maxpool2x2_nhwc(x)
    return x


def run_stage(stage, x):
    for p in stage['convs']:
        x = conv2d_nhwc(x, p['w'], p['b'], relu=True)
    h = stage['head']
    return _stage_head(x, h['w1'], h['b1'], h['w2'], h['b2'])


def dope_forward(params, x_nchw, stop_at_stage=6):
    """x_nchw: (N, 3, H, W), H and W divisible by 8.
    Returns ([belief_1..belief_S], [affinity_1..affinity_S]) in NCHW (f32)."""
    x = jnp.transpose(x_nchw, (0, 2, 3, 1)).astype(jnp.bfloat16)     # NCHW -> NHWC
    out1 = vgg_forward(params['vgg'], x)                              # (N, H/8, W/8, 128)

    beliefs, affinities = [], []
    prev_b = prev_a = None
    for s in range(stop_at_stage):
        if s == 0:
            inp = out1
        else:
            # torch.cat([out_2, out_1, out1], dim=1) -> channel concat (last axis in NHWC)
            inp = jnp.concatenate([prev_b.astype(jnp.bfloat16),
                                   prev_a.astype(jnp.bfloat16), out1], axis=-1)
        prev_b = run_stage(params['belief'][s], inp)
        prev_a = run_stage(params['affin'][s], inp)
        beliefs.append(prev_b)
        affinities.append(prev_a)

    to_nchw = lambda t: jnp.transpose(t, (0, 3, 1, 2)).astype(jnp.float32)
    return [to_nchw(t) for t in beliefs], [to_nchw(t) for t in affinities]


# -----------------------------------------------------------------------------
if __name__ == "__main__":
    key = jax.random.PRNGKey(0)
    pkey, xkey = jax.random.split(key)

    params = init_dope_params(pkey, num_belief=9, num_affinity=16, num_stages=6)

    # Small NCHW input consistent with the module: 3 channels, spatial 32
    # (VGG trunk downsamples by 8 -> 4x4 feature maps).
    x = jax.random.normal(xkey, (2, 3, 32, 32), jnp.float32)

    beliefs, affinities = dope_forward(params, x, stop_at_stage=6)
    jax.block_until_ready((beliefs, affinities))

    assert len(beliefs) == 6 and len(affinities) == 6
    for b in beliefs:
        assert b.shape == (2, 9, 4, 4), b.shape
    for a in affinities:
        assert a.shape == (2, 16, 4, 4), a.shape

    print("KERNEL_OK")
</pallas_src>

<mosaic_0001>
module attributes {stable_mosaic.version = 11 : i64} {
  func.func @_mm_kernel(%arg0: i32, %arg1: memref<512x27xbf16, #tpu.memory_space<vmem>>, %arg2: memref<27x64xbf16, #tpu.memory_space<vmem>>, %arg3: memref<1x64xf32, #tpu.memory_space<vmem>>, %arg4: memref<512x64xbf16, #tpu.memory_space<vmem>>) attributes {dimension_semantics = [#tpu.dimension_semantics<parallel>], iteration_bounds = array<i64: 4>, scalar_prefetch = 0 : i64, scratch_operands = 0 : i64, tpu.core_type = #tpu.core_type<tc>, window_params = [{transform_indices = @transform_0, window_bounds = array<i64: 512, 27>}, {pipeline_mode = #tpu.pipeline_mode<synchronous>, transform_indices = @transform_1, window_bounds = array<i64: 27, 64>}, {pipeline_mode = #tpu.pipeline_mode<synchronous>, transform_indices = @transform_2, window_bounds = array<i64: 1, 64>}, {transform_indices = @transform_3, window_bounds = array<i64: 512, 64>}]} {
    %c0 = arith.constant 0 : index
    %c0_0 = arith.constant 0 : index
    %0 = vector.load %arg1[%c0, %c0_0] : memref<512x27xbf16, #tpu.memory_space<vmem>>, vector<512x27xbf16>
    %c0_1 = arith.constant 0 : index
    %c0_2 = arith.constant 0 : index
    %1 = vector.load %arg2[%c0_1, %c0_2] : memref<27x64xbf16, #tpu.memory_space<vmem>>, vector<27x64xbf16>
    %cst = arith.constant dense<0.000000e+00> : vector<512x64xf32>
    %2 = tpu.matmul %0, %1, %cst {dimension_numbers = #tpu.dot_dimension_numbers<[1], [0], [0], [1], [0, 0, 1, 1], [], []>} : vector<512x27xbf16>, vector<27x64xbf16>, vector<512x64xf32> -> vector<512x64xf32>
    %c0_3 = arith.constant 0 : index
    %c0_4 = arith.constant 0 : index
    %3 = vector.load %arg3[%c0_3, %c0_4] : memref<1x64xf32, #tpu.memory_space<vmem>>, vector<1x64xf32>
    %4 = vector.broadcast %3 : vector<1x64xf32> to vector<512x64xf32>
    %5 = arith.addf %2, %4 : vector<512x64xf32>
    %cst_5 = arith.constant 0.000000e+00 : f32
    %6 = vector.broadcast %cst_5 : f32 to vector<512x64xf32>
    %7 = arith.maximumf %5, %6 : vector<512x64xf32>
    %8 = arith.truncf %7 : vector<512x64xf32> to vector<512x64xbf16>
    %c0_6 = arith.constant 0 : index
    %c0_7 = arith.constant 0 : index
    %9 = vector.load %arg4[%c0_6, %c0_7] : memref<512x64xbf16, #tpu.memory_space<vmem>>, vector<512x64xbf16>
    tpu.vector_store %arg4[%c0_6, %c0_7], %8 {strides = array<i32>} : memref<512x64xbf16, #tpu.memory_space<vmem>>, vector<512x64xbf16>,
    return
  }
  func.func @transform_0(%arg0: i32) -> (i32, i32) {
    %c0_i32 = arith.constant 0 : i32
    %c0_i32_0 = arith.constant 0 : i32
    return %arg0, %c0_i32 : i32, i32
  }
  func.func @transform_1(%arg0: i32) -> (i32, i32) {
    %c0_i32 = arith.constant 0 : i32
    %c0_i32_0 = arith.constant 0 : i32
    %c0_i32_1 = arith.constant 0 : i32
    return %c0_i32, %c0_i32_0 : i32, i32
  }
  func.func @transform_2(%arg0: i32) -> (i32, i32) {
    %c0_i32 = arith.constant 0 : i32
    %c0_i32_0 = arith.constant 0 : i32
    %c0_i32_1 = arith.constant 0 : i32
    return %c0_i32, %c0_i32_0 : i32, i32
  }
  func.func @transform_3(%arg0: i32) -> (i32, i32) {
    %c0_i32 = arith.constant 0 : i32
    %c0_i32_0 = arith.constant 0 : i32
    return %arg0, %c0_i32 : i32, i32
  }
}

</mosaic_0001>

<llo_original>
// kernel: _conv2d_folded.1
$region0: #{_conv2d_folded.1}
  #allocation0 [shape = 'u32[]', space=smem, size = 0x4, offset = 0x4, fixed_abs, tag = 'smem constant byte address 0x4 - core index']
  #allocation1 [shape = 'u32[144,128]{1,0:T(1,128)}', space=vmem, size = 0x12000, scoped, tag = 'internal scratch']
  %s0 = inlined_call_operand.vmem [shape: bf16[2048,27], index: 0, kind: input, shape index: {}]
  %s1 = inlined_call_operand.vmem [shape: bf16[27,64], index: 1, kind: input, shape index: {}]
  %s2 = inlined_call_operand.vmem [shape: f32[1,64], index: 2, kind: input, shape index: {}]
  %s3 = inlined_call_operand.hbm [shape: bf16[2048,64], index: 3, kind: output, shape index: {}]
  %s4 = sld [smem:[#allocation0]]
  $region45: #{_conv2d_folded.1} parent=0
    _
  %s6 = ssub.s32 1, %s4
  %s7 = scalar_select 0, %s6, %s4
  $region1: #{_conv2d_folded.1} parent=0
    #allocation2 [shape = 'u8[262144]{0}', space=vmem, size = 0x40000, scoped, tag = 'output window, operand 0']
    #allocation3 [shape = 's32[2]{0}', space=sflag, size = 0x8, scoped, tag = 'scoped memory for _conv2d_folded.1']
    %8 = vsyncpa [#allocation3], 0
    %s9 = scalar_lea.sflag [#allocation3], 1
    %10 = vsyncpa %s9, 0
    loop: start=0, step=1, limit=6
    $region2: #{_conv2d_folded.1} parent=1 // loop_pre_header
      _
    $region3: #{_conv2d_folded.1} parent=1 // loop_header
      %s12 = sphi 0, %s16
      %p13 = scmp.ge.s32.totalorder %s12, 6
      %s22 = sphi 0, %s24
      %s25 = sphi 0, %s22
      %s26 = sphi 0, %s25
      %s42 = sphi 0, %s26
      %s46 = sphi 0, %s46
      %s48 = sphi 0, %s46
      %s49 = sphi 0, %s48
      %s63 = sphi 0, %s49
      %s67 = sphi 0, %s67
      %s69 = sphi 0, %s67
      %s70 = sphi 0, %s69
      %s84 = sphi 0, %s70
      %s90 = sphi 0, %s92
      %s93 = sphi 0, %s90
      %s94 = sphi 0, %s93
      %s110 = sphi 0, %s94
    $region4: #{_conv2d_folded.1} parent=1 // loop_header_branch
      %15 = sbr.rel (%p13) target = $region8
    $region5: #{_conv2d_folded.1} parent=1 // loop_body
      %s17 = ssub.s32 %s12, 1
      %s18 = ssub.s32 %s12, 2
      %s19 = sadd.s32 %s12, 1
      %s20 = ssub.s32 %s12, %s19
      %p21 = scmp.eq.s32.totalorder %s20, 0
      %s23 = sadd.s32 %s22, 1
      %s24 = scalar_select %p21, %s22, %s23
      %p27 = pneg %p21
      %p28 = scmp.eq.s32.totalorder %s12, 3
      %p29 = por %p27, %p28
      %p30 = scmp.ne.s32.totalorder %s22, %s25
      %p31 = scmp.eq.s32.totalorder %s12, 0
      %p32 = por %p30, %p31
      %p33 = scmp.ne.s32.totalorder %s22, %s25
      %p34 = scmp.eq.s32.totalorder %s17, 3
      %p35 = por %p33, %p34
      %p36 = scmp.ne.s32.totalorder %s25, %s26
      %p37 = scmp.eq.s32.totalorder %s17, 0
      %p38 = por %p36, %p37
      %p39 = scmp.ne.s32.totalorder %s25, %s26
      %p40 = scmp.eq.s32.totalorder %s18, 3
      %p41 = por %p39, %p40
      %p43 = scmp.ne.s32.totalorder %s26, %s42
      %p44 = scmp.eq.s32.totalorder %s18, 0
      %p45 = por %p43, %p44
      %s47 = sadd.s32 %s46, 1
      %p50 = scmp.eq.s32.totalorder %s12, 3
      %p51 = scmp.ne.s32.totalorder %s46, %s48
      %p52 = scmp.eq.s32.totalorder %s12, 0
      %p53 = por %p51, %p52
      %p54 = scmp.ne.s32.totalorder %s46, %s48
      %p55 = scmp.eq.s32.totalorder %s17, 3
      %p56 = por %p54, %p55
      %p57 = scmp.ne.s32.totalorder %s48, %s49
      %p58 = scmp.eq.s32.totalorder %s17, 0
      %p59 = por %p57, %p58
      %p60 = scmp.ne.s32.totalorder %s48, %s49
      %p61 = scmp.eq.s32.totalorder %s18, 3
      %p62 = por %p60, %p61
      %p64 = scmp.ne.s32.totalorder %s49, %s63
      %p65 = scmp.eq.s32.totalorder %s18, 0
      %p66 = por %p64, %p65
      %s68 = sadd.s32 %s67, 1
      %p71 = scmp.eq.s32.totalorder %s12, 3
      %p72 = scmp.ne.s32.totalorder %s67, %s69
      %p73 = scmp.eq.s32.totalorder %s12, 0
      %p74 = por %p72, %p73
      %p75 = scmp.ne.s32.totalorder %s67, %s69
      %p76 = scmp.eq.s32.totalorder %s17, 3
      %p77 = por %p75, %p76
      %p78 = scmp.ne.s32.totalorder %s69, %s70
      %p79 = scmp.eq.s32.totalorder %s17, 0
      %p80 = por %p78, %p79
      %p81 = scmp.ne.s32.totalorder %s69, %s70
      %p82 = scmp.eq.s32.totalorder %s18, 3
      %p83 = por %p81, %p82
      %p85 = scmp.ne.s32.totalorder %s70, %s84
      %p86 = scmp.eq.s32.totalorder %s18, 0
      %p87 = por %p85, %p86
      %s88 = ssub.s32 %s12, %s19
      %p89 = scmp.eq.s32.totalorder %s88, 0
      %s91 = sadd.s32 %s90, 1
      %s92 = scalar_select %p89, %s90, %s91
      %p95 = pneg %p89
      %p96 = scmp.eq.s32.totalorder %s12, 3
      %p97 = por %p95, %p96
      %p98 = scmp.ne.s32.totalorder %s90, %s93
      %p99 = scmp.eq.s32.totalorder %s12, 0
      %p100 = por %p98, %p99
      %p101 = scmp.ne.s32.totalorder %s90, %s93
      %p102 = scmp.eq.s32.totalorder %s17, 3
      %p103 = por %p101, %p102
      %p104 = scmp.ne.s32.totalorder %s93, %s94
      %p105 = scmp.eq.s32.totalorder %s17, 0
      %p106 = por %p104, %p105
      %p107 = scmp.ne.s32.totalorder %s93, %s94
      %p108 = scmp.eq.s32.totalorder %s18, 3
      %p109 = por %p107, %p108
      %p111 = scmp.ne.s32.totalorder %s94, %s110
      %p112 = scmp.eq.s32.totalorder %s18, 0
      %p113 = por %p111, %p112
      %p114 = scmp.le.s32.totalorder 1, %s12
      %p115 = scmp.lt.s32.totalorder %s12, 5
      %p116 = pnand %p114, %p115
      %p117 = pneg %p116
      // Predicated region
      $region9: #{_conv2d_folded.1} parent=5 // pred_check
        _
      $region10: #{_conv2d_folded.1} parent=5 // pred_check_branch
        %119 = sbr.rel (%p116) target = $region12
      $region11: #{_conv2d_folded.1} parent=5 // pred_region
        %s120 = ssub.s32 %s12, 1
        // Predicated region
        $region13: #{_conv2d_folded.1} parent=11 // pred_check
          %p121 = pneg %p59
        $region14: #{_conv2d_folded.1} parent=11 // pred_check_branch
          %123 = sbr.rel (%p121) target = $region16
        $region15: #{_conv2d_folded.1} parent=11 // pred_region
          _
        $region16: #{_conv2d_folded.1} parent=11 // pred_fallthru
          _
        // Predicated region
        $region17: #{_conv2d_folded.1} parent=11 // pred_check
          %p124 = pneg %p80
        $region18: #{_conv2d_folded.1} parent=11 // pred_check_branch
          %126 = sbr.rel (%p124) target = $region20
        $region19: #{_conv2d_folded.1} parent=11 // pred_region
          _
        $region20: #{_conv2d_folded.1} parent=11 // pred_fallthru
          _
      $region12: #{_conv2d_folded.1} parent=5 // pred_fallthru
        _
      %p127 = scmp.lt.s32.totalorder %s12, 4
      // Predicated region
      $region21: #{_conv2d_folded.1} parent=5 // pred_check
        %p128 = pneg %p127
      $region22: #{_conv2d_folded.1} parent=5 // pred_check_branch
        %130 = sbr.rel (%p128) target = $region24
      $region23: #{_conv2d_folded.1} parent=5 // pred_region
        // Predicated region
        $region25: #{_conv2d_folded.1} parent=23 // pred_check
          %p131 = pneg %p32
        $region26: #{_conv2d_folded.1} parent=23 // pred_check_branch
          %133 = sbr.rel (%p131) target = $region28
        $region27: #{_conv2d_folded.1} parent=23 // pred_region
          %s134 = smul.u32 64, %s12
          %p135 = scmp.lt.s32.totalorder %s134, 255
          %s136 = scalar_select %p135, %s134, 255
          %s137 = smul.addr %s136, 4
          %s138 = scalar_lea.vmem %s0, %s137
          %s139 = smul.u32 64, %s12
        $region28: #{_conv2d_folded.1} parent=23 // pred_fallthru
          _
      $region24: #{_conv2d_folded.1} parent=5 // pred_fallthru
        _
      %p140 = scmp.le.s32.totalorder 1, %s12
      %p141 = scmp.lt.s32.totalorder %s12, 5
      %p142 = pnand %p140, %p141
      %p143 = pneg %p142
      // Predicated region
      $region29: #{_conv2d_folded.1} parent=5 // pred_check
        _
      $region30: #{_conv2d_folded.1} parent=5 // pred_check_branch
        %145 = sbr.rel (%p142) target = $region32
      $region31: #{_conv2d_folded.1} parent=5 // pred_region
        %s146 = ssub.s32 %s12, 1
        %s147 = smul.u32 64, %s17
        %p148 = scmp.lt.s32.totalorder %s147, 255
        %s149 = scalar_select %p148, %s147, 255
        %s150 = smul.addr %s149, 4
        %s151 = scalar_lea.vmem %s0, %s150
        %p152 = pneg %p38
        %p153 = pneg %p35
        %p154 = pneg %p59
        %p155 = pneg %p56
        %p156 = pneg %p80
        %p157 = pneg %p77
        %p158 = pneg %p106
        %p159 = pneg %p103
        %s160 = sand.u32 %s93, 1
        %s161 = scalar_lea.sflag [#allocation3], %s160
        %s162 = sand.u32 %s93, 1
        %s163 = smul.addr %s162, 256
        %s164 = scalar_lea.vmem [#allocation2], %s163
        %s165 = smul.u32 64, %s17
        %p166 = scmp.lt.s32.totalorder %s165, 255
        %s167 = scalar_select %p166, %s165, 255
        %s168 = smul.addr %s167, 4
        %s169 = scalar_lea.vmem %s0, %s168
        %s170 = smul.u32 64, %s17
        %s171 = smul.u32 64, %s17
        %v173 = vld [vmem:[%s169] sm:$0xf]
        %v174 = vld [vmem:[%s169 + $0x4] sm:$0xf]
        %v175 = vld [vmem:[%s169 + $0x8] sm:$0xf]
        %v176 = vld [vmem:[%s169 + $0xc] sm:$0xf]
        %v177 = vld [vmem:[%s169 + $0x10] sm:$0xf]
        %v178 = vld [vmem:[%s169 + $0x14] sm:$0xf]
        %v179 = vld [vmem:[%s169 + $0x18] sm:$0xf]
        %v180 = vld [vmem:[%s169 + $0x1c] sm:$0xf]
        %v181 = vld [vmem:[%s169 + $0x20] sm:$0xf]
        %v182 = vld [vmem:[%s169 + $0x24] sm:$0xf]
        %v183 = vld [vmem:[%s169 + $0x28] sm:$0xf]
        %v184 = vld [vmem:[%s169 + $0x2c] sm:$0xf]
        %v185 = vld [vmem:[%s169 + $0x30] sm:$0xf]
        %v186 = vld [vmem:[%s169 + $0x34] sm:$0xf]
        %v187 = vld [vmem:[%s169 + $0x38] sm:$0xf]
        %v188 = vld [vmem:[%s169 + $0x3c] sm:$0xf]
        %v189 = vld [vmem:[%s169 + $0x40] sm:$0xf]
        %v190 = vld [vmem:[%s169 + $0x44] sm:$0xf]
        %v191 = vld [vmem:[%s169 + $0x48] sm:$0xf]
        %v192 = vld [vmem:[%s169 + $0x4c] sm:$0xf]
        %v193 = vld [vmem:[%s169 + $0x50] sm:$0xf]
        %v194 = vld [vmem:[%s169 + $0x54] sm:$0xf]
        %v195 = vld [vmem:[%s169 + $0x58] sm:$0xf]
        %v196 = vld [vmem:[%s169 + $0x5c] sm:$0xf]
        %v197 = vld [vmem:[%s169 + $0x60] sm:$0xf]
        %v198 = vld [vmem:[%s169 + $0x64] sm:$0xf]
        %v199 = vld [vmem:[%s169 + $0x68] sm:$0xf]
        %v200 = vld [vmem:[%s169 + $0x6c] sm:$0xf]
        %v201 = vld [vmem:[%s169 + $0x70] sm:$0xf]
        %v202 = vld [vmem:[%s169 + $0x74] sm:$0xf]
        %v203 = vld [vmem:[%s169 + $0x78] sm:$0xf]
        %v204 = vld [vmem:[%s169 + $0x7c] sm:$0xf]
        %v205 = vld [vmem:[%s169 + $0x80] sm:$0xf]
        %v206 = vld [vmem:[%s169 + $0x84] sm:$0xf]
        %v207 = vld [vmem:[%s169 + $0x88] sm:$0xf]
        %v208 = vld [vmem:[%s169 + $0x8c] sm:$0xf]
        %v209 = vld [vmem:[%s169 + $0x90] sm:$0xf]
        %v210 = vld [vmem:[%s169 + $0x94] sm:$0xf]
        %v211 = vld [vmem:[%s169 + $0x98] sm:$0xf]
        %v212 = vld [vmem:[%s169 + $0x9c] sm:$0xf]
        %v213 = vld [vmem:[%s169 + $0xa0] sm:$0xf]
        %v214 = vld [vmem:[%s169 + $0xa4] sm:$0xf]
        %v215 = vld [vmem:[%s169 + $0xa8] sm:$0xf]
        %v216 = vld [vmem:[%s169 + $0xac] sm:$0xf]
        %v217 = vld [vmem:[%s169 + $0xb0] sm:$0xf]
        %v218 = vld [vmem:[%s169 + $0xb4] sm:$0xf]
        %v219 = vld [vmem:[%s169 + $0xb8] sm:$0xf]
        %v220 = vld [vmem:[%s169 + $0xbc] sm:$0xf]
        %v221 = vld [vmem:[%s169 + $0xc0] sm:$0xf]
        %v222 = vld [vmem:[%s169 + $0xc4] sm:$0xf]
        %v223 = vld [vmem:[%s169 + $0xc8] sm:$0xf]
        %v224 = vld [vmem:[%s169 + $0xcc] sm:$0xf]
        %v225 = vld [vmem:[%s169 + $0xd0] sm:$0xf]
        %v226 = vld [vmem:[%s169 + $0xd4] sm:$0xf]
        %v227 = vld [vmem:[%s169 + $0xd8] sm:$0xf]
        %v228 = vld [vmem:[%s169 + $0xdc] sm:$0xf]
        %v229 = vld [vmem:[%s169 + $0xe0] sm:$0xf]
        %v230 = vld [vmem:[%s169 + $0xe4] sm:$0xf]
        %v231 = vld [vmem:[%s169 + $0xe8] sm:$0xf]
        %v232 = vld [vmem:[%s169 + $0xec] sm:$0xf]
        %v233 = vld [vmem:[%s169 + $0xf0] sm:$0xf]
        %v234 = vld [vmem:[%s169 + $0xf4] sm:$0xf]
        %v235 = vld [vmem:[%s169 + $0xf8] sm:$0xf]
        %v236 = vld [vmem:[%s169 + $0xfc] sm:$0xf]
        %v237 = vld [vmem:[%s1] sm:$0xf]
        %v238 = vld [vmem:[%s1 + $0x4] sm:$0xf]
        %v239 = vld [vmem:[%s1 + $0x8] sm:$0xf]
        %v240 = vld [vmem:[%s1 + $0xc] sm:$0x3]
        %v241 = vld [vmem:[%s2] sm:$0x1]
        %v243 = vlaneseq
        %v244 = vshrl.u32 %v243, 7
        %v245 = vsub.s32 0, %v244
        %v246 = vrot.slane %v241, %v245
        %v312 = vunpack.c.l.b16 %v173
        %v313 = vunpack.c.l.b16 %v174
        %v314 = vunpack.c.l.b16 %v175
        %v315 = vunpack.c.l.b16 %v176
        %v316 = vunpack.c.l.b16 %v177
        %v317 = vunpack.c.l.b16 %v178
        %v318 = vunpack.c.l.b16 %v179
        %v319 = vunpack.c.l.b16 %v180
        %v320 = vunpack.c.l.b16 %v181
        %v321 = vunpack.c.l.b16 %v182
        %v322 = vunpack.c.l.b16 %v183
        %v323 = vunpack.c.l.b16 %v184
        %v324 = vunpack.c.l.b16 %v185
        %v325 = vunpack.c.l.b16 %v186
        %v326 = vunpack.c.l.b16 %v187
        %v327 = vunpack.c.l.b16 %v188
        %v328 = vunpack.c.l.b16 %v189
        %v329 = vunpack.c.l.b16 %v190
        %v330 = vunpack.c.l.b16 %v191
        %v331 = vunpack.c.l.b16 %v192
        %v332 = vunpack.c.l.b16 %v193
        %v333 = vunpack.c.l.b16 %v194
        %v334 = vunpack.c.l.b16 %v195
        %v335 = vunpack.c.l.b16 %v196
        %v336 = vunpack.c.l.b16 %v197
        %v337 = vunpack.c.l.b16 %v198
        %v338 = vunpack.c.l.b16 %v199
        %v339 = vunpack.c.l.b16 %v200
        %v340 = vunpack.c.l.b16 %v201
        %v341 = vunpack.c.l.b16 %v202
        %v342 = vunpack.c.l.b16 %v203
        %v343 = vunpack.c.l.b16 %v204
        %v344 = vunpack.c.l.b16 %v205
        %v345 = vunpack.c.l.b16 %v206
        %v346 = vunpack.c.l.b16 %v207
        %v347 = vunpack.c.l.b16 %v208
        %v348 = vunpack.c.l.b16 %v209
        %v349 = vunpack.c.l.b16 %v210
        %v350 = vunpack.c.l.b16 %v211
        %v351 = vunpack.c.l.b16 %v212
        %v352 = vunpack.c.l.b16 %v213
        %v353 = vunpack.c.l.b16 %v214
        %v354 = vunpack.c.l.b16 %v215
        %v355 = vunpack.c.l.b16 %v216
        %v356 = vunpack.c.l.b16 %v217
        %v357 = vunpack.c.l.b16 %v218
        %v358 = vunpack.c.l.b16 %v219
        %v359 = vunpack.c.l.b16 %v220
        %v360 = vunpack.c.l.b16 %v221
        %v361 = vunpack.c.l.b16 %v222
        %v362 = vunpack.c.l.b16 %v223
        %v363 = vunpack.c.l.b16 %v224
        %v364 = vunpack.c.l.b16 %v225
        %v365 = vunpack.c.l.b16 %v226
        %v366 = vunpack.c.l.b16 %v227
        %v367 = vunpack.c.l.b16 %v228
        %v368 = vunpack.c.l.b16 %v229
        %v369 = vunpack.c.l.b16 %v230
        %v370 = vunpack.c.l.b16 %v231
        %v371 = vunpack.c.l.b16 %v232
        %v372 = vunpack.c.l.b16 %v233
        %v373 = vunpack.c.l.b16 %v234
        %v374 = vunpack.c.l.b16 %v235
        %v375 = vunpack.c.l.b16 %v236
        %v376 = vpack.c.b16 %v313, %v312
        %v377 = vpack.c.b16 %v315, %v314
        %v378 = vpack.c.b16 %v317, %v316
        %v379 = vpack.c.b16 %v319, %v318
        %v380 = vpack.c.b16 %v321, %v320
        %v381 = vpack.c.b16 %v323, %v322
        %v382 = vpack.c.b16 %v325, %v324
        %v383 = vpack.c.b16 %v327, %v326
        %v384 = vpack.c.b16 %v329, %v328
        %v385 = vpack.c.b16 %v331, %v330
        %v386 = vpack.c.b16 %v333, %v332
        %v387 = vpack.c.b16 %v335, %v334
        %v388 = vpack.c.b16 %v337, %v336
        %v389 = vpack.c.b16 %v339, %v338
        %v390 = vpack.c.b16 %v341, %v340
        %v391 = vpack.c.b16 %v343, %v342
        %v392 = vpack.c.b16 %v345, %v344
        %v393 = vpack.c.b16 %v347, %v346
        %v394 = vpack.c.b16 %v349, %v348
        %v395 = vpack.c.b16 %v351, %v350
        %v396 = vpack.c.b16 %v353, %v352
        %v397 = vpack.c.b16 %v355, %v354
        %v398 = vpack.c.b16 %v357, %v356
        %v399 = vpack.c.b16 %v359, %v358
        %v400 = vpack.c.b16 %v361, %v360
        %v401 = vpack.c.b16 %v363, %v362
        %v402 = vpack.c.b16 %v365, %v364
        %v403 = vpack.c.b16 %v367, %v366
        %v404 = vpack.c.b16 %v369, %v368
        %v405 = vpack.c.b16 %v371, %v370
        %v406 = vpack.c.b16 %v373, %v372
        %v407 = vpack.c.b16 %v375, %v374
        %v412 = vunpack.c.l.b16 %v237
        %v413 = vunpack.c.l.b16 %v238
        %v414 = vunpack.c.l.b16 %v239
        %v415 = vunpack.c.l.b16 %v240
        %v416 = vpack.c.b16 %v413, %v412
        %v417 = vpack.c.b16 %v415, %v414
        %vm419 = vcmask 220160
        %v421 = vsel %vm419, %v376, 0
        %v424 = vsel %vm419, %v377, 0
        %v427 = vsel %vm419, %v378, 0
        %v430 = vsel %vm419, %v379, 0
        %v433 = vsel %vm419, %v380, 0
        %v436 = vsel %vm419, %v381, 0
        %v439 = vsel %vm419, %v382, 0
        %v442 = vsel %vm419, %v383, 0
        %v445 = vsel %vm419, %v384, 0
        %v448 = vsel %vm419, %v385, 0
        %v451 = vsel %vm419, %v386, 0
        %v454 = vsel %vm419, %v387, 0
        %v457 = vsel %vm419, %v388, 0
        %v460 = vsel %vm419, %v389, 0
        %v463 = vsel %vm419, %v390, 0
        %v466 = vsel %vm419, %v391, 0
        %v469 = vsel %vm419, %v392, 0
        %v472 = vsel %vm419, %v393, 0
        %v475 = vsel %vm419, %v394, 0
        %v478 = vsel %vm419, %v395, 0
        %v481 = vsel %vm419, %v396, 0
        %v484 = vsel %vm419, %v397, 0
        %v487 = vsel %vm419, %v398, 0
        %v490 = vsel %vm419, %v399, 0
        %v493 = vsel %vm419, %v400, 0
        %v496 = vsel %vm419, %v401, 0
        %v499 = vsel %vm419, %v402, 0
        %v502 = vsel %vm419, %v403, 0
        %v505 = vsel %vm419, %v404, 0
        %v508 = vsel %vm419, %v405, 0
        %v511 = vsel %vm419, %v406, 0
        %v514 = vsel %vm419, %v407, 0
        %vm516 = vcmask 1044480
        %vm517 = vcmask 1045504
        %v518 = vsel %vm516, 4294967295, 65535
        %v519 = vsel %vm517, %v518, 0
        %v521 = vand.u32 %v417, %v519
        %523 = vmatprep.subr.bf16.mxu0 0
        %524 = vmatpush1.bf16.msra.mxu0 %v416
        %525 = vmatprep.subr.bf16.mxu0 0
        %526 = vmatpush1.bf16.msra.mxu0 %v521
        %527 = vmatprep.subr.bf16.mxu0 0
        %528 = vmatpush1.bf16.msra.mxu0 0
        %529 = vmatprep.subr.bf16.mxu0 0
        %530 = vmatpush1.bf16.msra.mxu0 0
        %531 = vmatprep.subr.bf16.mxu0 0
        %532 = vmatpush1.bf16.msra.mxu0 0
        %533 = vmatprep.subr.bf16.mxu0 0
        %534 = vmatpush1.bf16.msra.mxu0 0
        %535 = vmatprep.subr.bf16.mxu0 0
        %536 = vmatpush1.bf16.msra.mxu0 0
        %537 = vmatprep.subr.bf16.mxu0 0
        %538 = vmatpush1.bf16.msra.mxu0 0
        %539 = vmatprep.subr.bf16.mxu0 0
        %540 = vmatpush1.bf16.msra.mxu0 0
        %541 = vmatprep.subr.bf16.mxu0 0
        %542 = vmatpush1.bf16.msra.mxu0 0
        %543 = vmatprep.subr.bf16.mxu0 0
        %544 = vmatpush1.bf16.msra.mxu0 0
        %545 = vmatprep.subr.bf16.mxu0 0
        %546 = vmatpush1.bf16.msra.mxu0 0
        %547 = vmatprep.subr.bf16.mxu0 0
        %548 = vmatpush1.bf16.msra.mxu0 0
        %549 = vmatprep.subr.bf16.mxu0 0
        %550 = vmatpush1.bf16.msra.mxu0 0
        %551 = vmatprep.subr.bf16.mxu0 0
        %552 = vmatpush1.bf16.msra.mxu0 0
        %553 = vmatprep.subr.bf16.mxu0 0
        %554 = vmatpush1.bf16.msra.mxu0 0
        %555 = vmatprep.mubr.bf16.mxu0 0
        %556 = vmatmul.mubr.bf16.gmra.mrb[0].mxu0 %v421
        %v557 = vpop.f32.mrb[0].mxu0
        %v558 = vadd.f32 %v246, %v557
        %v559 = vpop.f32.mrb[0].mxu0
        %v560 = vpop.f32.mrb[0].mxu0
        %v561 = vadd.f32 %v246, %v560
        %v562 = vpop.f32.mrb[0].mxu0
        %563 = vmatprep.mubr.bf16.mxu0 0
        %564 = vmatmul.mubr.bf16.gmra.mrb[0].mxu0 %v424
        %v565 = vpop.f32.mrb[0].mxu0
        %v566 = vadd.f32 %v246, %v565
        %v567 = vpop.f32.mrb[0].mxu0
        %v568 = vpop.f32.mrb[0].mxu0
        %v569 = vadd.f32 %v246, %v568
        %v570 = vpop.f32.mrb[0].mxu0
        %571 = vmatprep.mubr.bf16.mxu0 0
        %572 = vmatmul.mubr.bf16.gmra.mrb[0].mxu0 %v427
        %v573 = vpop.f32.mrb[0].mxu0
        %v574 = vadd.f32 %v246, %v573
        %v575 = vpop.f32.mrb[0].mxu0
        %v576 = vpop.f32.mrb[0].mxu0
        %v577 = vadd.f32 %v246, %v576
        %v578 = vpop.f32.mrb[0].mxu0
        %579 = vmatprep.mubr.bf16.mxu0 0
        %580 = vmatmul.mubr.bf16.gmra.mrb[0].mxu0 %v430
        %v581 = vpop.f32.mrb[0].mxu0
        %v582 = vadd.f32 %v246, %v581
        %v583 = vpop.f32.mrb[0].mxu0
        %v584 = vpop.f32.mrb[0].mxu0
        %v585 = vadd.f32 %v246, %v584
        %v586 = vpop.f32.mrb[0].mxu0
        %587 = vmatprep.mubr.bf16.mxu0 0
        %588 = vmatmul.mubr.bf16.gmra.mrb[0].mxu0 %v433
        %v589 = vpop.f32.mrb[0].mxu0
        %v590 = vadd.f32 %v246, %v589
        %v591 = vpop.f32.mrb[0].mxu0
        %v592 = vpop.f32.mrb[0].mxu0
        %v593 = vadd.f32 %v246, %v592
        %v594 = vpop.f32.mrb[0].mxu0
        %595 = vmatprep.mubr.bf16.mxu0 0
        %596 = vmatmul.mubr.bf16.gmra.mrb[0].mxu0 %v436
        %v597 = vpop.f32.mrb[0].mxu0
        %v598 = vadd.f32 %v246, %v597
        %v599 = vpop.f32.mrb[0].mxu0
        %v600 = vpop.f32.mrb[0].mxu0
        %v601 = vadd.f32 %v246, %v600
        %v602 = vpop.f32.mrb[0].mxu0
        %603 = vmatprep.mubr.bf16.mxu0 0
        %604 = vmatmul.mubr.bf16.gmra.mrb[0].mxu0 %v439
        %v605 = vpop.f32.mrb[0].mxu0
        %v606 = vadd.f32 %v246, %v605
        %v607 = vpop.f32.mrb[0].mxu0
        %v608 = vpop.f32.mrb[0].mxu0
        %v609 = vadd.f32 %v246, %v608
        %v610 = vpop.f32.mrb[0].mxu0
        %611 = vmatprep.mubr.bf16.mxu0 0
        %612 = vmatmul.mubr.bf16.gmra.mrb[0].mxu0 %v442
        %v613 = vpop.f32.mrb[0].mxu0
        %v614 = vadd.f32 %v246, %v613
        %v615 = vpop.f32.mrb[0].mxu0
        %v616 = vpop.f32.mrb[0].mxu0
        %v617 = vadd.f32 %v246, %v616
        %v618 = vpop.f32.mrb[0].mxu0
        %619 = vmatprep.mubr.bf16.mxu0 0
        %620 = vmatmul.mubr.bf16.gmra.mrb[0].mxu0 %v445
        %v621 = vpop.f32.mrb[0].mxu0
        %v622 = vadd.f32 %v246, %v621
        %v623 = vpop.f32.mrb[0].mxu0
        %v624 = vpop.f32.mrb[0].mxu0
        %v625 = vadd.f32 %v246, %v624
        %v626 = vpop.f32.mrb[0].mxu0
        %627 = vmatprep.mubr.bf16.mxu0 0
        %628 = vmatmul.mubr.bf16.gmra.mrb[0].mxu0 %v448
        %v629 = vpop.f32.mrb[0].mxu0
        %v630 = vadd.f32 %v246, %v629
        %v631 = vpop.f32.mrb[0].mxu0
        %v632 = vpop.f32.mrb[0].mxu0
        %v633 = vadd.f32 %v246, %v632
        %v634 = vpop.f32.mrb[0].mxu0
        %635 = vmatprep.mubr.bf16.mxu0 0
        %636 = vmatmul.mubr.bf16.gmra.mrb[0].mxu0 %v451
        %v637 = vpop.f32.mrb[0].mxu0
        %v638 = vadd.f32 %v246, %v637
        %v639 = vpop.f32.mrb[0].mxu0
        %v640 = vpop.f32.mrb[0].mxu0
        %v641 = vadd.f32 %v246, %v640
        %v642 = vpop.f32.mrb[0].mxu0
        %643 = vmatprep.mubr.bf16.mxu0 0
        %644 = vmatmul.mubr.bf16.gmra.mrb[0].mxu0 %v454
        %v645 = vpop.f32.mrb[0].mxu0
        %v646 = vadd.f32 %v246, %v645
        %v647 = vpop.f32.mrb[0].mxu0
        %v648 = vpop.f32.mrb[0].mxu0
        %v649 = vadd.f32 %v246, %v648
        %v650 = vpop.f32.mrb[0].mxu0
        %651 = vmatprep.mubr.bf16.mxu0 0
        %652 = vmatmul.mubr.bf16.gmra.mrb[0].mxu0 %v457
        %v653 = vpop.f32.mrb[0].mxu0
        %v654 = vadd.f32 %v246, %v653
        %v655 = vpop.f32.mrb[0].mxu0
        %v656 = vpop.f32.mrb[0].mxu0
        %v657 = vadd.f32 %v246, %v656
        %v658 = vpop.f32.mrb[0].mxu0
        %659 = vmatprep.mubr.bf16.mxu0 0
        %660 = vmatmul.mubr.bf16.gmra.mrb[0].mxu0 %v460
        %v661 = vpop.f32.mrb[0].mxu0
        %v662 = vadd.f32 %v246, %v661
        %v663 = vpop.f32.mrb[0].mxu0
        %v664 = vpop.f32.mrb[0].mxu0
        %v665 = vadd.f32 %v246, %v664
        %v666 = vpop.f32.mrb[0].mxu0
        %667 = vmatprep.mubr.bf16.mxu0 0
        %668 = vmatmul.mubr.bf16.gmra.mrb[0].mxu0 %v463
        %v669 = vpop.f32.mrb[0].mxu0
        %v670 = vadd.f32 %v246, %v669
        %v671 = vpop.f32.mrb[0].mxu0
        %v672 = vpop.f32.mrb[0].mxu0
        %v673 = vadd.f32 %v246, %v672
        %v674 = vpop.f32.mrb[0].mxu0
        %675 = vmatprep.mubr.bf16.mxu0 0
        %676 = vmatmul.mubr.bf16.gmra.mrb[0].mxu0 %v466
        %v677 = vpop.f32.mrb[0].mxu0
        %v678 = vadd.f32 %v246, %v677
        %v679 = vpop.f32.mrb[0].mxu0
        %v680 = vpop.f32.mrb[0].mxu0
        %v681 = vadd.f32 %v246, %v680
        %v682 = vpop.f32.mrb[0].mxu0
        %683 = vmatprep.mubr.bf16.mxu0 0
        %684 = vmatmul.mubr.bf16.gmra.mrb[0].mxu0 %v469
        %v685 = vpop.f32.mrb[0].mxu0
        %v686 = vadd.f32 %v246, %v685
        %v687 = vpop.f32.mrb[0].mxu0
        %v688 = vpop.f32.mrb[0].mxu0
        %v689 = vadd.f32 %v246, %v688
        %v690 = vpop.f32.mrb[0].mxu0
        %691 = vmatprep.mubr.bf16.mxu0 0
        %692 = vmatmul.mubr.bf16.gmra.mrb[0].mxu0 %v472
        %v693 = vpop.f32.mrb[0].mxu0
        %v694 = vadd.f32 %v246, %v693
        %v695 = vpop.f32.mrb[0].mxu0
        %v696 = vpop.f32.mrb[0].mxu0
        %v697 = vadd.f32 %v246, %v696
        %v698 = vpop.f32.mrb[0].mxu0
        %699 = vmatprep.mubr.bf16.mxu0 0
        %700 = vmatmul.mubr.bf16.gmra.mrb[0].mxu0 %v475
        %v701 = vpop.f32.mrb[0].mxu0
        %v702 = vadd.f32 %v246, %v701
        %v703 = vpop.f32.mrb[0].mxu0
        %v704 = vpop.f32.mrb[0].mxu0
        %v705 = vadd.f32 %v246, %v704
        %v706 = vpop.f32.mrb[0].mxu0
        %707 = vmatprep.mubr.bf16.mxu0 0
        %708 = vmatmul.mubr.bf16.gmra.mrb[0].mxu0 %v478
        %v709 = vpop.f32.mrb[0].mxu0
        %v710 = vadd.f32 %v246, %v709
        %v711 = vpop.f32.mrb[0].mxu0
        %v712 = vpop.f32.mrb[0].mxu0
        %v713 = vadd.f32 %v246, %v712
        %v714 = vpop.f32.mrb[0].mxu0
        %715 = vmatprep.mubr.bf16.mxu0 0
        %716 = vmatmul.mubr.bf16.gmra.mrb[0].mxu0 %v481
        %v717 = vpop.f32.mrb[0].mxu0
        %v718 = vadd.f32 %v246, %v717
        %v719 = vpop.f32.mrb[0].mxu0
        %v720 = vpop.f32.mrb[0].mxu0
        %v721 = vadd.f32 %v246, %v720
        %v722 = vpop.f32.mrb[0].mxu0
        %723 = vmatprep.mubr.bf16.mxu0 0
        %724 = vmatmul.mubr.bf16.gmra.mrb[0].mxu0 %v484
        %v725 = vpop.f32.mrb[0].mxu0
        %v726 = vadd.f32 %v246, %v725
        %v727 = vpop.f32.mrb[0].mxu0
        %v728 = vpop.f32.mrb[0].mxu0
        %v729 = vadd.f32 %v246, %v728
        %v730 = vpop.f32.mrb[0].mxu0
        %731 = vmatprep.mubr.bf16.mxu0 0
        %732 = vmatmul.mubr.bf16.gmra.mrb[0].mxu0 %v487
        %v733 = vpop.f32.mrb[0].mxu0
        %v734 = vadd.f32 %v246, %v733
        %v735 = vpop.f32.mrb[0].mxu0
        %v736 = vpop.f32.mrb[0].mxu0
        %v737 = vadd.f32 %v246, %v736
        %v738 = vpop.f32.mrb[0].mxu0
        %739 = vmatprep.mubr.bf16.mxu0 0
        %740 = vmatmul.mubr.bf16.gmra.mrb[0].mxu0 %v490
        %v741 = vpop.f32.mrb[0].mxu0
        %v742 = vadd.f32 %v246, %v741
        %v743 = vpop.f32.mrb[0].mxu0
        %v744 = vpop.f32.mrb[0].mxu0
        %v745 = vadd.f32 %v246, %v744
        %v746 = vpop.f32.mrb[0].mxu0
        %747 = vmatprep.mubr.bf16.mxu0 0
        %748 = vmatmul.mubr.bf16.gmra.mrb[0].mxu0 %v493
        %v749 = vpop.f32.mrb[0].mxu0
        %v750 = vadd.f32 %v246, %v749
        %v751 = vpop.f32.mrb[0].mxu0
        %v752 = vpop.f32.mrb[0].mxu0
        %v753 = vadd.f32 %v246, %v752
        %v754 = vpop.f32.mrb[0].mxu0
        %755 = vmatprep.mubr.bf16.mxu0 0
        %756 = vmatmul.mubr.bf16.gmra.mrb[0].mxu0 %v496
        %v757 = vpop.f32.mrb[0].mxu0
        %v758 = vadd.f32 %v246, %v757
        %v759 = vpop.f32.mrb[0].mxu0
        %v760 = vpop.f32.mrb[0].mxu0
        %v761 = vadd.f32 %v246, %v760
        %v762 = vpop.f32.mrb[0].mxu0
        %763 = vmatprep.mubr.bf16.mxu0 0
        %764 = vmatmul.mubr.bf16.gmra.mrb[0].mxu0 %v499
        %v765 = vpop.f32.mrb[0].mxu0
        %v766 = vadd.f32 %v246, %v765
        %v767 = vpop.f32.mrb[0].mxu0
        %v768 = vpop.f32.mrb[0].mxu0
        %v769 = vadd.f32 %v246, %v768
        %v770 = vpop.f32.mrb[0].mxu0
        %771 = vmatprep.mubr.bf16.mxu0 0
        %772 = vmatmul.mubr.bf16.gmra.mrb[0].mxu0 %v502
        %v773 = vpop.f32.mrb[0].mxu0
        %v774 = vadd.f32 %v246, %v773
        %v775 = vpop.f32.mrb[0].mxu0
        %v776 = vpop.f32.mrb[0].mxu0
        %v777 = vadd.f32 %v246, %v776
        %v778 = vpop.f32.mrb[0].mxu0
        %779 = vmatprep.mubr.bf16.mxu0 0
        %780 = vmatmul.mubr.bf16.gmra.mrb[0].mxu0 %v505
        %v781 = vpop.f32.mrb[0].mxu0
        %v782 = vadd.f32 %v246, %v781
        %v783 = vpop.f32.mrb[0].mxu0
        %v784 = vpop.f32.mrb[0].mxu0
        %v785 = vadd.f32 %v246, %v784
        %v786 = vpop.f32.mrb[0].mxu0
        %787 = vmatprep.mubr.bf16.mxu0 0
        %788 = vmatmul.mubr.bf16.gmra.mrb[0].mxu0 %v508
        %v789 = vpop.f32.mrb[0].mxu0
        %v790 = vadd.f32 %v246, %v789
        %v791 = vpop.f32.mrb[0].mxu0
        %v792 = vpop.f32.mrb[0].mxu0
        %v793 = vadd.f32 %v246, %v792
        %v794 = vpop.f32.mrb[0].mxu0
        %795 = vmatprep.mubr.bf16.mxu0 0
        %796 = vmatmul.mubr.bf16.gmra.mrb[0].mxu0 %v511
        %v797 = vpop.f32.mrb[0].mxu0
        %v798 = vadd.f32 %v246, %v797
        %v799 = vpop.f32.mrb[0].mxu0
        %v800 = vpop.f32.mrb[0].mxu0
        %v801 = vadd.f32 %v246, %v800
        %v802 = vpop.f32.mrb[0].mxu0
        %803 = vmatprep.mubr.bf16.mxu0 0
        %804 = vmatmul.mubr.bf16.gmra.mrb[0].mxu0 %v514
        %v805 = vpop.f32.mrb[0].mxu0
        %v806 = vadd.f32 %v246, %v805
        %v807 = vpop.f32.mrb[0].mxu0
        %v808 = vpop.f32.mrb[0].mxu0
        %v809 = vadd.f32 %v246, %v808
        %v810 = vpop.f32.mrb[0].mxu0
        %811 = vdwg.mxu0
        %v812 = vmax.f32 %v558, 0.0
        %v813 = vmax.f32 %v561, 0.0
        %v814 = vmax.f32 %v566, 0.0
        %v815 = vmax.f32 %v569, 0.0
        %v816 = vmax.f32 %v574, 0.0
        %v817 = vmax.f32 %v577, 0.0
        %v818 = vmax.f32 %v582, 0.0
        %v819 = vmax.f32 %v585, 0.0
        %v820 = vmax.f32 %v590, 0.0
        %v821 = vmax.f32 %v593, 0.0
        %v822 = vmax.f32 %v598, 0.0
        %v823 = vmax.f32 %v601, 0.0
        %v824 = vmax.f32 %v606, 0.0
        %v825 = vmax.f32 %v609, 0.0
        %v826 = vmax.f32 %v614, 0.0
        %v827 = vmax.f32 %v617, 0.0
        %v828 = vmax.f32 %v622, 0.0
        %v829 = vmax.f32 %v625, 0.0
        %v830 = vmax.f32 %v630, 0.0
        %v831 = vmax.f32 %v633, 0.0
        %v832 = vmax.f32 %v638, 0.0
        %v833 = vmax.f32 %v641, 0.0
        %v834 = vmax.f32 %v646, 0.0
        %v835 = vmax.f32 %v649, 0.0
        %v836 = vmax.f32 %v654, 0.0
        %v837 = vmax.f32 %v657, 0.0
        %v838 = vmax.f32 %v662, 0.0
        %v839 = vmax.f32 %v665, 0.0
        %v840 = vmax.f32 %v670, 0.0
        %v841 = vmax.f32 %v673, 0.0
        %v842 = vmax.f32 %v678, 0.0
        %v843 = vmax.f32 %v681, 0.0
        %v844 = vmax.f32 %v686, 0.0
        %v845 = vmax.f32 %v689, 0.0
        %v846 = vmax.f32 %v694, 0.0
        %v847 = vmax.f32 %v697, 0.0
        %v848 = vmax.f32 %v702, 0.0
        %v849 = vmax.f32 %v705, 0.0
        %v850 = vmax.f32 %v710, 0.0
        %v851 = vmax.f32 %v713, 0.0
        %v852 = vmax.f32 %v718, 0.0
        %v853 = vmax.f32 %v721, 0.0
        %v854 = vmax.f32 %v726, 0.0
        %v855 = vmax.f32 %v729, 0.0
        %v856 = vmax.f32 %v734, 0.0
        %v857 = vmax.f32 %v737, 0.0
        %v858 = vmax.f32 %v742, 0.0
        %v859 = vmax.f32 %v745, 0.0
        %v860 = vmax.f32 %v750, 0.0
        %v861 = vmax.f32 %v753, 0.0
        %v862 = vmax.f32 %v758, 0.0
        %v863 = vmax.f32 %v761, 0.0
        %v864 = vmax.f32 %v766, 0.0
        %v865 = vmax.f32 %v769, 0.0
        %v866 = vmax.f32 %v774, 0.0
        %v867 = vmax.f32 %v777, 0.0
        %v868 = vmax.f32 %v782, 0.0
        %v869 = vmax.f32 %v785, 0.0
        %v870 = vmax.f32 %v790, 0.0
        %v871 = vmax.f32 %v793, 0.0
        %v872 = vmax.f32 %v798, 0.0
        %v873 = vmax.f32 %v801, 0.0
        %v874 = vmax.f32 %v806, 0.0
        %v875 = vmax.f32 %v809, 0.0
        %v876 = vpack.c.bf16 %v813, %v812
        %v877 = vpack.c.bf16 %v815, %v814
        %v878 = vpack.c.bf16 %v817, %v816
        %v879 = vpack.c.bf16 %v819, %v818
        %v880 = vpack.c.bf16 %v821, %v820
        %v881 = vpack.c.bf16 %v823, %v822
        %v882 = vpack.c.bf16 %v825, %v824
        %v883 = vpack.c.bf16 %v827, %v826
        %v884 = vpack.c.bf16 %v829, %v828
        %v885 = vpack.c.bf16 %v831, %v830
        %v886 = vpack.c.bf16 %v833, %v832
        %v887 = vpack.c.bf16 %v835, %v834
        %v888 = vpack.c.bf16 %v837, %v836
        %v889 = vpack.c.bf16 %v839, %v838
        %v890 = vpack.c.bf16 %v841, %v840
        %v891 = vpack.c.bf16 %v843, %v842
        %v892 = vpack.c.bf16 %v845, %v844
        %v893 = vpack.c.bf16 %v847, %v846
        %v894 = vpack.c.bf16 %v849, %v848
        %v895 = vpack.c.bf16 %v851, %v850
        %v896 = vpack.c.bf16 %v853, %v852
        %v897 = vpack.c.bf16 %v855, %v854
        %v898 = vpack.c.bf16 %v857, %v856
        %v899 = vpack.c.bf16 %v859, %v858
        %v900 = vpack.c.bf16 %v861, %v860
        %v901 = vpack.c.bf16 %v863, %v862
        %v902 = vpack.c.bf16 %v865, %v864
        %v903 = vpack.c.bf16 %v867, %v866
        %v904 = vpack.c.bf16 %v869, %v868
        %v905 = vpack.c.bf16 %v871, %v870
        %v906 = vpack.c.bf16 %v873, %v872
        %v907 = vpack.c.bf16 %v875, %v874
        %v940 = vunpack.c.l.b16 %v876
        %v941 = vunpack.c.h.b16 %v876
        %v942 = vunpack.c.l.b16 %v877
        %v943 = vunpack.c.h.b16 %v877
        %v944 = vunpack.c.l.b16 %v878
        %v945 = vunpack.c.h.b16 %v878
        %v946 = vunpack.c.l.b16 %v879
        %v947 = vunpack.c.h.b16 %v879
        %v948 = vunpack.c.l.b16 %v880
        %v949 = vunpack.c.h.b16 %v880
        %v950 = vunpack.c.l.b16 %v881
        %v951 = vunpack.c.h.b16 %v881
        %v952 = vunpack.c.l.b16 %v882
        %v953 = vunpack.c.h.b16 %v882
        %v954 = vunpack.c.l.b16 %v883
        %v955 = vunpack.c.h.b16 %v883
        %v956 = vunpack.c.l.b16 %v884
        %v957 = vunpack.c.h.b16 %v884
        %v958 = vunpack.c.l.b16 %v885
        %v959 = vunpack.c.h.b16 %v885
        %v960 = vunpack.c.l.b16 %v886
        %v961 = vunpack.c.h.b16 %v886
        %v962 = vunpack.c.l.b16 %v887
        %v963 = vunpack.c.h.b16 %v887
        %v964 = vunpack.c.l.b16 %v888
        %v965 = vunpack.c.h.b16 %v888
        %v966 = vunpack.c.l.b16 %v889
        %v967 = vunpack.c.h.b16 %v889
        %v968 = vunpack.c.l.b16 %v890
        %v969 = vunpack.c.h.b16 %v890
        %v970 = vunpack.c.l.b16 %v891
        %v971 = vunpack.c.h.b16 %v891
        %v972 = vunpack.c.l.b16 %v892
        %v973 = vunpack.c.h.b16 %v892
        %v974 = vunpack.c.l.b16 %v893
        %v975 = vunpack.c.h.b16 %v893
        %v976 = vunpack.c.l.b16 %v894
        %v977 = vunpack.c.h.b16 %v894
        %v978 = vunpack.c.l.b16 %v895
        %v979 = vunpack.c.h.b16 %v895
        %v980 = vunpack.c.l.b16 %v896
        %v981 = vunpack.c.h.b16 %v896
        %v982 = vunpack.c.l.b16 %v897
        %v983 = vunpack.c.h.b16 %v897
        %v984 = vunpack.c.l.b16 %v898
        %v985 = vunpack.c.h.b16 %v898
        %v986 = vunpack.c.l.b16 %v899
        %v987 = vunpack.c.h.b16 %v899
        %v988 = vunpack.c.l.b16 %v900
        %v989 = vunpack.c.h.b16 %v900
        %v990 = vunpack.c.l.b16 %v901
        %v991 = vunpack.c.h.b16 %v901
        %v992 = vunpack.c.l.b16 %v902
        %v993 = vunpack.c.h.b16 %v902
        %v994 = vunpack.c.l.b16 %v903
        %v995 = vunpack.c.h.b16 %v903
        %v996 = vunpack.c.l.b16 %v904
        %v997 = vunpack.c.h.b16 %v904
        %v998 = vunpack.c.l.b16 %v905
        %v999 = vunpack.c.h.b16 %v905
        %v1000 = vunpack.c.l.b16 %v906
        %v1001 = vunpack.c.h.b16 %v906
        %v1002 = vunpack.c.l.b16 %v907
        %v1003 = vunpack.c.h.b16 %v907
        %v1004 = vpack.c.b16 %v940, %v940
        %v1005 = vpack.c.b16 %v941, %v941
        %v1006 = vpack.c.b16 %v942, %v942
        %v1007 = vpack.c.b16 %v943, %v943
        %v1008 = vpack.c.b16 %v944, %v944
        %v1009 = vpack.c.b16 %v945, %v945
        %v1010 = vpack.c.b16 %v946, %v946
        %v1011 = vpack.c.b16 %v947, %v947
        %v1012 = vpack.c.b16 %v948, %v948
        %v1013 = vpack.c.b16 %v949, %v949
        %v1014 = vpack.c.b16 %v950, %v950
        %v1015 = vpack.c.b16 %v951, %v951
        %v1016 = vpack.c.b16 %v952, %v952
        %v1017 = vpack.c.b16 %v953, %v953
        %v1018 = vpack.c.b16 %v954, %v954
        %v1019 = vpack.c.b16 %v955, %v955
        %v1020 = vpack.c.b16 %v956, %v956
        %v1021 = vpack.c.b16 %v957, %v957
        %v1022 = vpack.c.b16 %v958, %v958
        %v1023 = vpack.c.b16 %v959, %v959
        %v1024 = vpack.c.b16 %v960, %v960
        %v1025 = vpack.c.b16 %v961, %v961
        %v1026 = vpack.c.b16 %v962, %v962
        %v1027 = vpack.c.b16 %v963, %v963
        %v1028 = vpack.c.b16 %v964, %v964
        %v1029 = vpack.c.b16 %v965, %v965
        %v1030 = vpack.c.b16 %v966, %v966
        %v1031 = vpack.c.b16 %v967, %v967
        %v1032 = vpack.c.b16 %v968, %v968
        %v1033 = vpack.c.b16 %v969, %v969
        %v1034 = vpack.c.b16 %v970, %v970
        %v1035 = vpack.c.b16 %v971, %v971
        %v1036 = vpack.c.b16 %v972, %v972
        %v1037 = vpack.c.b16 %v973, %v973
        %v1038 = vpack.c.b16 %v974, %v974
        %v1039 = vpack.c.b16 %v975, %v975
        %v1040 = vpack.c.b16 %v976, %v976
        %v1041 = vpack.c.b16 %v977, %v977
        %v1042 = vpack.c.b16 %v978, %v978
        %v1043 = vpack.c.b16 %v979, %v979
        %v1044 = vpack.c.b16 %v980, %v980
        %v1045 = vpack.c.b16 %v981, %v981
        %v1046 = vpack.c.b16 %v982, %v982
        %v1047 = vpack.c.b16 %v983, %v983
        %v1048 = vpack.c.b16 %v984, %v984
        %v1049 = vpack.c.b16 %v985, %v985
        %v1050 = vpack.c.b16 %v986, %v986
        %v1051 = vpack.c.b16 %v987, %v987
        %v1052 = vpack.c.b16 %v988, %v988
        %v1053 = vpack.c.b16 %v989, %v989
        %v1054 = vpack.c.b16 %v990, %v990
        %v1055 = vpack.c.b16 %v991, %v991
        %v1056 = vpack.c.b16 %v992, %v992
        %v1057 = vpack.c.b16 %v993, %v993
        %v1058 = vpack.c.b16 %v994, %v994
        %v1059 = vpack.c.b16 %v995, %v995
        %v1060 = vpack.c.b16 %v996, %v996
        %v1061 = vpack.c.b16 %v997, %v997
        %v1062 = vpack.c.b16 %v998, %v998
        %v1063 = vpack.c.b16 %v999, %v999
        %v1064 = vpack.c.b16 %v1000, %v1000
        %v1065 = vpack.c.b16 %v1001, %v1001
        %v1066 = vpack.c.b16 %v1002, %v1002
        %v1067 = vpack.c.b16 %v1003, %v1003
        %vm1132 = vcmask 519168
        %1133 = vst.msk [vmem:[%s164] sm:$0xf] %vm1132, %v1004
        %1134 = vst.msk [vmem:[%s164 + $0x4] sm:$0xf] %vm1132, %v1005
        %1135 = vst.msk [vmem:[%s164 + $0x8] sm:$0xf] %vm1132, %v1006
        %1136 = vst.msk [vmem:[%s164 + $0xc] sm:$0xf] %vm1132, %v1007
        %1137 = vst.msk [vmem:[%s164 + $0x10] sm:$0xf] %vm1132, %v1008
        %1138 = vst.msk [vmem:[%s164 + $0x14] sm:$0xf] %vm1132, %v1009
        %1139 = vst.msk [vmem:[%s164 + $0x18] sm:$0xf] %vm1132, %v1010
        %1140 = vst.msk [vmem:[%s164 + $0x1c] sm:$0xf] %vm1132, %v1011
        %1141 = vst.msk [vmem:[%s164 + $0x20] sm:$0xf] %vm1132, %v1012
        %1142 = vst.msk [vmem:[%s164 + $0x24] sm:$0xf] %vm1132, %v1013
        %1143 = vst.msk [vmem:[%s164 + $0x28] sm:$0xf] %vm1132, %v1014
        %1144 = vst.msk [vmem:[%s164 + $0x2c] sm:$0xf] %vm1132, %v1015
        %1145 = vst.msk [vmem:[%s164 + $0x30] sm:$0xf] %vm1132, %v1016
        %1146 = vst.msk [vmem:[%s164 + $0x34] sm:$0xf] %vm1132, %v1017
        %1147 = vst.msk [vmem:[%s164 + $0x38] sm:$0xf] %vm1132, %v1018
        %1148 = vst.msk [vmem:[%s164 + $0x3c] sm:$0xf] %vm1132, %v1019
        %1149 = vst.msk [vmem:[%s164 + $0x40] sm:$0xf] %vm1132, %v1020
        %1150 = vst.msk [vmem:[%s164 + $0x44] sm:$0xf] %vm1132, %v1021
        %1151 = vst.msk [vmem:[%s164 + $0x48] sm:$0xf] %vm1132, %v1022
        %1152 = vst.msk [vmem:[%s164 + $0x4c] sm:$0xf] %vm1132, %v1023
        %1153 = vst.msk [vmem:[%s164 + $0x50] sm:$0xf] %vm1132, %v1024
        %1154 = vst.msk [vmem:[%s164 + $0x54] sm:$0xf] %vm1132, %v1025
        %1155 = vst.msk [vmem:[%s164 + $0x58] sm:$0xf] %vm1132, %v1026
        %1156 = vst.msk [vmem:[%s164 + $0x5c] sm:$0xf] %vm1132, %v1027
        %1157 = vst.msk [vmem:[%s164 + $0x60] sm:$0xf] %vm1132, %v1028
        %1158 = vst.msk [vmem:[%s164 + $0x64] sm:$0xf] %vm1132, %v1029
        %1159 = vst.msk [vmem:[%s164 + $0x68] sm:$0xf] %vm1132, %v1030
        %1160 = vst.msk [vmem:[%s164 + $0x6c] sm:$0xf] %vm1132, %v1031
        %1161 = vst.msk [vmem:[%s164 + $0x70] sm:$0xf] %vm1132, %v1032
        %1162 = vst.msk [vmem:[%s164 + $0x74] sm:$0xf] %vm1132, %v1033
        %1163 = vst.msk [vmem:[%s164 + $0x78] sm:$0xf] %vm1132, %v1034
        %1164 = vst.msk [vmem:[%s164 + $0x7c] sm:$0xf] %vm1132, %v1035
        %1165 = vst.msk [vmem:[%s164 + $0x80] sm:$0xf] %vm1132, %v1036
        %1166 = vst.msk [vmem:[%s164 + $0x84] sm:$0xf] %vm1132, %v1037
        %1167 = vst.msk [vmem:[%s164 + $0x88] sm:$0xf] %vm1132, %v1038
        %1168 = vst.msk [vmem:[%s164 + $0x8c] sm:$0xf] %vm1132, %v1039
        %1169 = vst.msk [vmem:[%s164 + $0x90] sm:$0xf] %vm1132, %v1040
        %1170 = vst.msk [vmem:[%s164 + $0x94] sm:$0xf] %vm1132, %v1041
        %1171 = vst.msk [vmem:[%s164 + $0x98] sm:$0xf] %vm1132, %v1042
        %1172 = vst.msk [vmem:[%s164 + $0x9c] sm:$0xf] %vm1132, %v1043
        %1173 = vst.msk [vmem:[%s164 + $0xa0] sm:$0xf] %vm1132, %v1044
        %1174 = vst.msk [vmem:[%s164 + $0xa4] sm:$0xf] %vm1132, %v1045
        %1175 = vst.msk [vmem:[%s164 + $0xa8] sm:$0xf] %vm1132, %v1046
        %1176 = vst.msk [vmem:[%s164 + $0xac] sm:$0xf] %vm1132, %v1047
        %1177 = vst.msk [vmem:[%s164 + $0xb0] sm:$0xf] %vm1132, %v1048
        %1178 = vst.msk [vmem:[%s164 + $0xb4] sm:$0xf] %vm1132, %v1049
        %1179 = vst.msk [vmem:[%s164 + $0xb8] sm:$0xf] %vm1132, %v1050
        %1180 = vst.msk [vmem:[%s164 + $0xbc] sm:$0xf] %vm1132, %v1051
        %1181 = vst.msk [vmem:[%s164 + $0xc0] sm:$0xf] %vm1132, %v1052
        %1182 = vst.msk [vmem:[%s164 + $0xc4] sm:$0xf] %vm1132, %v1053
        %1183 = vst.msk [vmem:[%s164 + $0xc8] sm:$0xf] %vm1132, %v1054
        %1184 = vst.msk [vmem:[%s164 + $0xcc] sm:$0xf] %vm1132, %v1055
        %1185 = vst.msk [vmem:[%s164 + $0xd0] sm:$0xf] %vm1132, %v1056
        %1186 = vst.msk [vmem:[%s164 + $0xd4] sm:$0xf] %vm1132, %v1057
        %1187 = vst.msk [vmem:[%s164 + $0xd8] sm:$0xf] %vm1132, %v1058
        %1188 = vst.msk [vmem:[%s164 + $0xdc] sm:$0xf] %vm1132, %v1059
        %1189 = vst.msk [vmem:[%s164 + $0xe0] sm:$0xf] %vm1132, %v1060
        %1190 = vst.msk [vmem:[%s164 + $0xe4] sm:$0xf] %vm1132, %v1061
        %1191 = vst.msk [vmem:[%s164 + $0xe8] sm:$0xf] %vm1132, %v1062
        %1192 = vst.msk [vmem:[%s164 + $0xec] sm:$0xf] %vm1132, %v1063
        %1193 = vst.msk [vmem:[%s164 + $0xf0] sm:$0xf] %vm1132, %v1064
        %1194 = vst.msk [vmem:[%s164 + $0xf4] sm:$0xf] %vm1132, %v1065
        %1195 = vst.msk [vmem:[%s164 + $0xf8] sm:$0xf] %vm1132, %v1066
        %1196 = vst.msk [vmem:[%s164 + $0xfc] sm:$0xf] %vm1132, %v1067
        %s1197 = sand.u32 %s93, 1
        %s1198 = scalar_lea.sflag [#allocation3], %s1197
        %s1199 = sand.u32 %s93, 1
        %s1200 = smul.addr %s1199, 256
        %s1201 = scalar_lea.vmem [#allocation2], %s1200
        // Predicated region
        $region33: #{_conv2d_folded.1} parent=31 // pred_check
          %p1202 = pneg %p103
        $region34: #{_conv2d_folded.1} parent=31 // pred_check_branch
          %1204 = sbr.rel (%p1202) target = $region36
        $region35: #{_conv2d_folded.1} parent=31 // pred_region
          %s1205 = smul.u32 64, %s17
          %s1207 = ssub.s32 4096, 4096
          %1208 = vsyncadd %s1198, %s1207
          %s1209 = smul.addr %s1205, 64
          %s1210 = scalar_lea.hbm %s3, %s1209
          %s1211 = sshll.u32 %s1201, 4
          %s1212 = int_to_ptr.vmem [resolvable:$true] %s1211
          %1217 = dma.vmem_to_hbm [thread:$0]  %s1212, 4096, %s1210, %s1198, 64, 64, 4
        $region36: #{_conv2d_folded.1} parent=31 // pred_fallthru
          _
      $region32: #{_conv2d_folded.1} parent=5 // pred_fallthru
        _
      %p1218 = scmp.le.s32.totalorder 2, %s12
      // Predicated region
      $region37: #{_conv2d_folded.1} parent=5 // pred_check
        %p1219 = pneg %p1218
      $region38: #{_conv2d_folded.1} parent=5 // pred_check_branch
        %1221 = sbr.rel (%p1219) target = $region40
      $region39: #{_conv2d_folded.1} parent=5 // pred_region
        %s1222 = ssub.s32 %s12, 2
        // Predicated region
        $region41: #{_conv2d_folded.1} parent=39 // pred_check
          %p1223 = pneg %p109
        $region42: #{_conv2d_folded.1} parent=39 // pred_check_branch
          %1225 = sbr.rel (%p1223) target = $region44
        $region43: #{_conv2d_folded.1} parent=39 // pred_region
          %s1226 = sand.u32 %s94, 1
          %s1227 = scalar_lea.sflag [#allocation3], %s1226
          %s1228 = sand.u32 %s94, 1
          %s1229 = smul.addr %s1228, 256
          %s1230 = scalar_lea.vmem [#allocation2], %s1229
          %1231 = dma.done %s1227, 4096
        $region44: #{_conv2d_folded.1} parent=39 // pred_fallthru
          _
      $region40: #{_conv2d_folded.1} parent=5 // pred_fallthru
        _
    $region6: #{_conv2d_folded.1} parent=1 // loop_footer
      %s16 = sadd.s32 1, %s12
    $region7: #{_conv2d_folded.1} parent=1 // loop_footer_branch
      %11 = sbr.rel target = $region3
    $region8: #{_conv2d_folded.1} parent=1 // loop_exit
      _
    %1232 = vsyncpa [#allocation3], 1
    %s1233 = scalar_lea.sflag [#allocation3], 1
    %1234 = vsyncpa %s1233, 1

</llo_original>
